<compile_context>
chip_gen: v7x
topology: tpu7x:2x2x1
jax: 0.10.0
libtpu: 0.0.40
codegen_flags: <defaults>
</compile_context>

<pallas_src>
import jax
import jax.numpy as jnp
from jax import lax
from jax.experimental import pallas as pl
from jax.experimental.pallas import tpu as pltpu

_MIB = 1024 * 1024
_SUBLANE = {4: 8, 2: 16, 1: 32}  # second-to-last-dim multiple per itemsize


def _round_up(x, m):
    return ((x + m - 1) // m) * m


def _vmem_budget_bytes():
    """Usable VMEM for this kernel: physical capacity minus headroom, capped."""
    cap = None
    try:
        info = pltpu.get_tpu_info()
        cap = getattr(info, "vmem_capacity_bytes", None)
    except Exception:
        cap = None
    if not cap:
        cap = 64 * _MIB  # conservative default = v7x per-TensorCore VMEM
    # Leave compiler/internal-scratch headroom; never claim more than ~100 MiB
    # even on 128-MiB parts.  -> ~48 MiB on v7x, ~100 MiB on v5e/v6e.
    return int(min(cap - 16 * _MIB, 100 * _MIB))


def _choose_tiles(M, K, N, in_isz, out_isz, budget):
    """Return (tm, tn, M_p, N_p, w_resident, vmem_need), or None if the
    contraction dim is too large for a single-pass tile (needs K tiling)."""
    sub = _SUBLANE.get(in_isz, 8)
    lane = 128
    n128 = _round_up(N, lane)

    # Weight residency: whole (N_p, K) weight lives in VMEM once.
    resident_cap = min(budget // 3, 32 * _MIB)
    resident = n128 * K * in_isz <= resident_cap
    tn = n128 if resident else min(512, n128)

    # M tiling: >=2 blocks when possible (both v7x TensorCores get work);
    # tm chosen so M padding, if any, is at most a few sublanes.
    grid_m = max(2 if M >= 2 * sub else 1, -(-M // 512))
    tm = _round_up(-(-M // grid_m), sub)

    def vmem_need(tm_, tn_, res_):
        w_bufs = 1 if res_ else 2
        return (w_bufs * tn_ * K * in_isz       # weight (Buffered(1) if resident)
                + 2 * tm_ * K * in_isz          # x, double-buffered
                + 2 * tm_ * tn_ * out_isz       # out, double-buffered
                + 2 * tn_ * 4                   # bias
                + tm_ * tn_ * 4)                # f32 matmul-result headroom

    while vmem_need(tm, tn, resident) > budget:
        if tm > sub:
            tm = max(sub, (tm // 2) // sub * sub)
        elif resident:
            resident, tn = False, min(512, n128)
        elif tn > lane:
            tn = max(lane, (tn // 2) // lane * lane)
        else:
            return None  # would need a K-tiled accumulator
    M_p = _round_up(M, tm)
    N_p = _round_up(N, tn)
    return tm, tn, M_p, N_p, resident, vmem_need(tm, tn, resident)


def _linear_bias_kernel(x_ref, w_ref, b_ref, o_ref):
    # x_ref: (tm, K)  activations tile
    # w_ref: (tn, K)  weight tile in native PyTorch (out, in) layout
    # b_ref: (1, tn)  bias tile (lane-dense)
    # o_ref: (tm, tn) output tile
    acc = lax.dot_general(
        x_ref[...],
        w_ref[...],
        dimension_numbers=(((1,), (1,)), ((), ())),  # contract K with K (W.T on MXU)
        preferred_element_type=jnp.float32,
    )
    # Reference forward applies no activation (module name notwithstanding).
    o_ref[...] = (acc + b_ref[...].astype(jnp.float32)).astype(o_ref.dtype)


def simple_mlp_with_gelu_forward(x, weight, bias, *, compute_dtype=None,
                                 force_pallas=False):
    """x: (B, C, S); weight: (O, C) PyTorch Linear layout; bias: (O,) -> (B, O, S)."""
    B, C, S = x.shape
    O, K_w = weight.shape
    assert K_w == C, (weight.shape, C)
    out_dtype = x.dtype
    # Pass compute_dtype=jnp.bfloat16 on v6e/v7x for MXU-peak throughput when
    # the caller's tolerance allows; default keeps the module's f32 numerics.
    compute_dtype = compute_dtype or x.dtype

    # torch: x = x.view(-1, C)  (row-major regroup)
    x2d = jnp.reshape(x, (-1, C))
    M, K = x2d.shape
    N = O

    def _xla_path():
        y = jnp.dot(x2d.astype(compute_dtype), weight.astype(compute_dtype).T,
                    preferred_element_type=jnp.float32)
        y = (y + bias.astype(jnp.float32)).astype(out_dtype)
        return jnp.reshape(y, (B, -1, S))

    # Small-problem fast path: launch/pad overhead dominates; XLA is faster.
    if not force_pallas and (M * K * N) < (1 << 20):
        return _xla_path()

    in_isz = jnp.dtype(compute_dtype).itemsize
    out_isz = jnp.dtype(out_dtype).itemsize
    budget = _vmem_budget_bytes()

    tiles = _choose_tiles(M, K, N, in_isz, out_isz, budget)
    if tiles is None:
        # TODO(synk): contraction dim too large for a single-pass VMEM tile; a
        # K-tiled accumulator variant would be needed here — fall back to XLA.
        return _xla_path()
    tm, tn, M_p, N_p, w_resident, need = tiles

    # Host-side prep: x is only touched if the dtype changes or M needs a few
    # padding rows; K is never padded.  Weight/bias N-padding (< one tile of
    # zero rows) keeps every output store lane-dense (unmasked vst).
    x_in = x2d.astype(compute_dtype) if compute_dtype != x2d.dtype else x2d
    if M_p != M:
        x_in = jnp.pad(x_in, ((0, M_p - M), (0, 0)))
    w_in = weight.astype(compute_dtype) if compute_dtype != weight.dtype else weight
    if N_p != N:
        w_in = jnp.pad(w_in, ((0, N_p - N), (0, 0)))
        b_in = jnp.pad(jnp.reshape(bias, (1, N)), ((0, 0), (0, N_p - N)))
    else:
        b_in = jnp.reshape(bias, (1, N))

    grid = (M_p // tm, N_p // tn)
    vmem_limit = int(min(budget, max(16 * _MIB, 2 * need)))

    def _call(single_buffer_resident):
        w_kw, b_kw = {}, {}
        if single_buffer_resident and w_resident and grid[1] == 1:
            # Block index never changes -> no second pipeline buffer needed.
            w_kw = dict(pipeline_mode=pl.Buffered(1))
            b_kw = dict(pipeline_mode=pl.Buffered(1))
        return pl.pallas_call(
            _linear_bias_kernel,
            out_shape=jax.ShapeDtypeStruct((M_p, N_p), out_dtype),
            grid_spec=pltpu.PrefetchScalarGridSpec(
                num_scalar_prefetch=0,
                grid=grid,
                in_specs=[
                    pl.BlockSpec((tm, K), lambda i, j: (i, 0)),           # x
                    pl.BlockSpec((tn, K), lambda i, j: (j, 0), **w_kw),   # W (O, K)
                    pl.BlockSpec((1, tn), lambda i, j: (0, j), **b_kw),   # bias
                ],
                out_specs=pl.BlockSpec((tm, tn), lambda i, j: (i, j)),
            ),
            compiler_params=pltpu.CompilerParams(
                dimension_semantics=("parallel", "parallel"),
                vmem_limit_bytes=vmem_limit,
            ),
        )(x_in, w_in, b_in)

    try:
        y_p = _call(True)
    except Exception:
        # pl.Buffered(1) / pipeline_mode unsupported in this build — retry with
        # default double-buffering (VMEM budget already accounts for headroom).
        y_p = _call(False)

    y2d = y_p[:M, :N] if (M_p != M or N_p != N) else y_p
    # torch: x = x.view(B, -1, S)  (row-major regroup)
    return jnp.reshape(y2d, (B, -1, S))


if __name__ == "__main__":
    # Module hyper-params (hidden_size is unused by the module, as in PyTorch).
    B, input_size, S = 2, 4, 16
    hidden_size = 32   # unused — the reference module never touches it
    output_size = 8

    key = jax.random.PRNGKey(0)
    kx, kw, kb = jax.random.split(key, 3)

    x = jax.random.normal(kx, (B, input_size, S), dtype=jnp.float32)
    # Deterministic stand-ins for nn.Linear(input_size, output_size) params.
    weight = jax.random.normal(kw, (output_size, input_size), dtype=jnp.float32) * 0.1
    bias = jax.random.normal(kb, (output_size,), dtype=jnp.float32) * 0.1

    # Reference in plain JAX (same row-major .view semantics as the module).
    ref = jnp.reshape(
        jnp.reshape(x, (-1, input_size)) @ weight.T + bias, (B, -1, S)
    )

    # Pallas path (forced so the kernel itself is exercised at this small size).
    out = simple_mlp_with_gelu_forward(x, weight, bias, force_pallas=True)
    out = jax.block_until_ready(out)
    assert out.shape == (B, output_size, S), out.shape
    assert jnp.allclose(out, ref, atol=1e-5, rtol=1e-5)

    # Default dispatch (small-problem fast path -> XLA) must match too.
    out_fast = jax.block_until_ready(simple_mlp_with_gelu_forward(x, weight, bias))
    assert jnp.allclose(out_fast, ref, atol=1e-5, rtol=1e-5)

    print("KERNEL_OK")
</pallas_src>

<mosaic_0001>
module attributes {stable_mosaic.version = 11 : i64} {
  func.func @_linear_bias_kernel(%arg0: i32, %arg1: i32, %arg2: memref<16x4xf32, #tpu.memory_space<vmem>>, %arg3: memref<128x4xf32, #tpu.memory_space<vmem>>, %arg4: memref<1x128xf32, #tpu.memory_space<vmem>>, %arg5: memref<16x128xf32, #tpu.memory_space<vmem>>) attributes {dimension_semantics = [#tpu.dimension_semantics<parallel>, #tpu.dimension_semantics<parallel>], iteration_bounds = array<i64: 2, 1>, scalar_prefetch = 0 : i64, scratch_operands = 0 : i64, tpu.core_type = #tpu.core_type<tc>, window_params = [{transform_indices = @transform_0, window_bounds = array<i64: 16, 4>}, {pipeline_mode = #tpu.pipeline_mode<synchronous>, transform_indices = @transform_1, window_bounds = array<i64: 128, 4>}, {pipeline_mode = #tpu.pipeline_mode<synchronous>, transform_indices = @transform_2, window_bounds = array<i64: 1, 128>}, {transform_indices = @transform_3, window_bounds = array<i64: 16, 128>}]} {
    %c0 = arith.constant 0 : index
    %c0_0 = arith.constant 0 : index
    %0 = vector.load %arg2[%c0, %c0_0] : memref<16x4xf32, #tpu.memory_space<vmem>>, vector<16x4xf32>
    %c0_1 = arith.constant 0 : index
    %c0_2 = arith.constant 0 : index
    %1 = vector.load %arg3[%c0_1, %c0_2] : memref<128x4xf32, #tpu.memory_space<vmem>>, vector<128x4xf32>
    %cst = arith.constant dense<0.000000e+00> : vector<16x128xf32>
    %2 = tpu.matmul %0, %1, %cst {dimension_numbers = #tpu.dot_dimension_numbers<[1], [1], [0], [0], [0, 0, 1, 0], [], []>} : vector<16x4xf32>, vector<128x4xf32>, vector<16x128xf32> -> vector<16x128xf32>
    %c0_3 = arith.constant 0 : index
    %c0_4 = arith.constant 0 : index
    %3 = vector.load %arg4[%c0_3, %c0_4] : memref<1x128xf32, #tpu.memory_space<vmem>>, vector<1x128xf32>
    %4 = vector.broadcast %3 : vector<1x128xf32> to vector<16x128xf32>
    %5 = arith.addf %2, %4 : vector<16x128xf32>
    %c0_5 = arith.constant 0 : index
    %c0_6 = arith.constant 0 : index
    %6 = vector.load %arg5[%c0_5, %c0_6] : memref<16x128xf32, #tpu.memory_space<vmem>>, vector<16x128xf32>
    tpu.vector_store %arg5[%c0_5, %c0_6], %5 {strides = array<i32>} : memref<16x128xf32, #tpu.memory_space<vmem>>, vector<16x128xf32>,
    return
  }
  func.func @transform_0(%arg0: i32, %arg1: i32) -> (i32, i32) {
    %c0_i32 = arith.constant 0 : i32
    %c0_i32_0 = arith.constant 0 : i32
    return %arg0, %c0_i32 : i32, i32
  }
  func.func @transform_1(%arg0: i32, %arg1: i32) -> (i32, i32) {
    %c0_i32 = arith.constant 0 : i32
    %c0_i32_0 = arith.constant 0 : i32
    return %arg1, %c0_i32 : i32, i32
  }
  func.func @transform_2(%arg0: i32, %arg1: i32) -> (i32, i32) {
    %c0_i32 = arith.constant 0 : i32
    %c0_i32_0 = arith.constant 0 : i32
    return %c0_i32, %arg1 : i32, i32
  }
  func.func @transform_3(%arg0: i32, %arg1: i32) -> (i32, i32) {
    %c0_i32 = arith.constant 0 : i32
    return %arg0, %arg1 : i32, i32
  }
}

module attributes {stable_mosaic.version = 11 : i64} {
  func.func @_linear_bias_kernel(%arg0: i32, %arg1: i32, %arg2: memref<16x4xf32, #tpu.memory_space<vmem>>, %arg3: memref<128x4xf32, #tpu.memory_space<vmem>>, %arg4: memref<1x128xf32, #tpu.memory_space<vmem>>, %arg5: memref<16x128xf32, #tpu.memory_space<vmem>>) attributes {dimension_semantics = [#tpu.dimension_semantics<parallel>, #tpu.dimension_semantics<parallel>], iteration_bounds = array<i64: 2, 1>, scalar_prefetch = 0 : i64, scratch_operands = 0 : i64, tpu.core_type = #tpu.core_type<tc>, window_params = [{transform_indices = @transform_0, window_bounds = array<i64: 16, 4>}, {transform_indices = @transform_1, window_bounds = array<i64: 128, 4>}, {transform_indices = @transform_2, window_bounds = array<i64: 1, 128>}, {transform_indices = @transform_3, window_bounds = array<i64: 16, 128>}]} {
    %c0 = arith.constant 0 : index
    %c0_0 = arith.constant 0 : index
    %0 = vector.load %arg2[%c0, %c0_0] : memref<16x4xf32, #tpu.memory_space<vmem>>, vector<16x4xf32>
    %c0_1 = arith.constant 0 : index
    %c0_2 = arith.constant 0 : index
    %1 = vector.load %arg3[%c0_1, %c0_2] : memref<128x4xf32, #tpu.memory_space<vmem>>, vector<128x4xf32>
    %cst = arith.constant dense<0.000000e+00> : vector<16x128xf32>
    %2 = tpu.matmul %0, %1, %cst {dimension_numbers = #tpu.dot_dimension_numbers<[1], [1], [0], [0], [0, 0, 1, 0], [], []>} : vector<16x4xf32>, vector<128x4xf32>, vector<16x128xf32> -> vector<16x128xf32>
    %c0_3 = arith.constant 0 : index
    %c0_4 = arith.constant 0 : index
    %3 = vector.load %arg4[%c0_3, %c0_4] : memref<1x128xf32, #tpu.memory_space<vmem>>, vector<1x128xf32>
    %4 = vector.broadcast %3 : vector<1x128xf32> to vector<16x128xf32>
    %5 = arith.addf %2, %4 : vector<16x128xf32>
    %c0_5 = arith.constant 0 : index
    %c0_6 = arith.constant 0 : index
    %6 = vector.load %arg5[%c0_5, %c0_6] : memref<16x128xf32, #tpu.memory_space<vmem>>, vector<16x128xf32>
    tpu.vector_store %arg5[%c0_5, %c0_6], %5 {strides = array<i32>} : memref<16x128xf32, #tpu.memory_space<vmem>>, vector<16x128xf32>,
    return
  }
  func.func @transform_0(%arg0: i32, %arg1: i32) -> (i32, i32) {
    %c0_i32 = arith.constant 0 : i32
    %c0_i32_0 = arith.constant 0 : i32
    return %arg0, %c0_i32 : i32, i32
  }
  func.func @transform_1(%arg0: i32, %arg1: i32) -> (i32, i32) {
    %c0_i32 = arith.constant 0 : i32
    %c0_i32_0 = arith.constant 0 : i32
    return %arg1, %c0_i32 : i32, i32
  }
  func.func @transform_2(%arg0: i32, %arg1: i32) -> (i32, i32) {
    %c0_i32 = arith.constant 0 : i32
    %c0_i32_0 = arith.constant 0 : i32
    return %c0_i32, %arg1 : i32, i32
  }
  func.func @transform_3(%arg0: i32, %arg1: i32) -> (i32, i32) {
    %c0_i32 = arith.constant 0 : i32
    return %arg0, %arg1 : i32, i32
  }
}

</mosaic_0001>

<llo_original>
// kernel: tpu_custom_call.1
$region0: #{tpu_custom_call.1}
  #allocation0 [shape = 'u32[]', space=smem, size = 0x4, offset = 0x4, fixed_abs, tag = 'smem constant byte address 0x4 - core index']
  #allocation1 [shape = 'u32[144,128]{1,0:T(1,128)}', space=vmem, size = 0x12000, scoped, tag = 'internal scratch']
  %s0 = inlined_call_operand.vmem [shape: f32[32,4], index: 0, kind: input, shape index: {}]
  %s1 = inlined_call_operand.vmem [shape: f32[128,4], index: 1, kind: input, shape index: {}]
  %s2 = inlined_call_operand.vmem [shape: f32[1,128], index: 2, kind: input, shape index: {}]
  %s3 = inlined_call_operand.hbm [shape: f32[32,128], index: 3, kind: output, shape index: {}]
  %s4 = sld [smem:[#allocation0]]
  $region45: #{tpu_custom_call.1} parent=0
    _
  %s6 = ssub.s32 1, %s4
  %s7 = scalar_select 0, %s6, %s4
  $region1: #{tpu_custom_call.1} parent=0
    #allocation2 [shape = 'u8[16384]{0}', space=vmem, size = 0x4000, scoped, tag = 'output window, operand 0']
    #allocation3 [shape = 's32[2]{0}', space=sflag, size = 0x8, scoped, tag = 'scoped memory for tpu_custom_call.1']
    %8 = vsyncpa [#allocation3], 0
    %s9 = scalar_lea.sflag [#allocation3], 1
    %10 = vsyncpa %s9, 0
    loop: start=0, step=1, limit=4
    $region2: #{tpu_custom_call.1} parent=1 // loop_pre_header
      _
    $region3: #{tpu_custom_call.1} parent=1 // loop_header
      %s12 = sphi 0, %s16
      %p13 = scmp.ge.s32.totalorder %s12, 4
      %s19 = sphi 0, %s31
      %s20 = sphi 0, %s27
      %s21 = sphi 0, %s19
      %s22 = sphi 0, %s20
      %s23 = sphi 0, %s21
      %s24 = sphi 0, %s22
      %s34 = sphi 0, %s36
      %s37 = sphi 0, %s34
      %s38 = sphi 0, %s37
      %s54 = sphi 0, %s38
      %s60 = sphi 0, %s62
      %s63 = sphi 0, %s60
      %s64 = sphi 0, %s63
      %s80 = sphi 0, %s64
      %s86 = sphi 0, %s88
      %s89 = sphi 0, %s86
      %s90 = sphi 0, %s89
      %s106 = sphi 0, %s90
      %s114 = sphi 0, %s116
      %s117 = sphi 0, %s114
      %s118 = sphi 0, %s117
      %s134 = sphi 0, %s118
    $region4: #{tpu_custom_call.1} parent=1 // loop_header_branch
      %15 = sbr.rel (%p13) target = $region8
    $region5: #{tpu_custom_call.1} parent=1 // loop_body
      %s17 = ssub.s32 %s12, 1
      %s18 = ssub.s32 %s12, 2
      %s25 = sadd.s32 1, %s20
      %p26 = scmp.ge.s32.totalorder %s25, 1
      %s27 = scalar_select %p26, 0, %s25
      %s28 = sadd.s32 1, %s19
      %s29 = scalar_select %p26, %s28, %s19
      %p30 = scmp.ge.s32.totalorder %s29, 2
      %s31 = scalar_select %p30, 0, %s29
      %s32 = ssub.s32 %s19, %s31
      %p33 = scmp.eq.s32.totalorder %s32, 0
      %s35 = sadd.s32 %s34, 1
      %s36 = scalar_select %p33, %s34, %s35
      %p39 = pneg %p33
      %p40 = scmp.eq.s32.totalorder %s12, 1
      %p41 = por %p39, %p40
      %p42 = scmp.ne.s32.totalorder %s34, %s37
      %p43 = scmp.eq.s32.totalorder %s12, 0
      %p44 = por %p42, %p43
      %p45 = scmp.ne.s32.totalorder %s34, %s37
      %p46 = scmp.eq.s32.totalorder %s17, 1
      %p47 = por %p45, %p46
      %p48 = scmp.ne.s32.totalorder %s37, %s38
      %p49 = scmp.eq.s32.totalorder %s17, 0
      %p50 = por %p48, %p49
      %p51 = scmp.ne.s32.totalorder %s37, %s38
      %p52 = scmp.eq.s32.totalorder %s18, 1
      %p53 = por %p51, %p52
      %p55 = scmp.ne.s32.totalorder %s38, %s54
      %p56 = scmp.eq.s32.totalorder %s18, 0
      %p57 = por %p55, %p56
      %s58 = ssub.s32 %s20, %s27
      %p59 = scmp.eq.s32.totalorder %s58, 0
      %s61 = sadd.s32 %s60, 1
      %s62 = scalar_select %p59, %s60, %s61
      %p65 = pneg %p59
      %p66 = scmp.eq.s32.totalorder %s12, 1
      %p67 = por %p65, %p66
      %p68 = scmp.ne.s32.totalorder %s60, %s63
      %p69 = scmp.eq.s32.totalorder %s12, 0
      %p70 = por %p68, %p69
      %p71 = scmp.ne.s32.totalorder %s60, %s63
      %p72 = scmp.eq.s32.totalorder %s17, 1
      %p73 = por %p71, %p72
      %p74 = scmp.ne.s32.totalorder %s63, %s64
      %p75 = scmp.eq.s32.totalorder %s17, 0
      %p76 = por %p74, %p75
      %p77 = scmp.ne.s32.totalorder %s63, %s64
      %p78 = scmp.eq.s32.totalorder %s18, 1
      %p79 = por %p77, %p78
      %p81 = scmp.ne.s32.totalorder %s64, %s80
      %p82 = scmp.eq.s32.totalorder %s18, 0
      %p83 = por %p81, %p82
      %s84 = ssub.s32 %s20, %s27
      %p85 = scmp.eq.s32.totalorder %s84, 0
      %s87 = sadd.s32 %s86, 1
      %s88 = scalar_select %p85, %s86, %s87
      %p91 = pneg %p85
      %p92 = scmp.eq.s32.totalorder %s12, 1
      %p93 = por %p91, %p92
      %p94 = scmp.ne.s32.totalorder %s86, %s89
      %p95 = scmp.eq.s32.totalorder %s12, 0
      %p96 = por %p94, %p95
      %p97 = scmp.ne.s32.totalorder %s86, %s89
      %p98 = scmp.eq.s32.totalorder %s17, 1
      %p99 = por %p97, %p98
      %p100 = scmp.ne.s32.totalorder %s89, %s90
      %p101 = scmp.eq.s32.totalorder %s17, 0
      %p102 = por %p100, %p101
      %p103 = scmp.ne.s32.totalorder %s89, %s90
      %p104 = scmp.eq.s32.totalorder %s18, 1
      %p105 = por %p103, %p104
      %p107 = scmp.ne.s32.totalorder %s90, %s106
      %p108 = scmp.eq.s32.totalorder %s18, 0
      %p109 = por %p107, %p108
      %s110 = ssub.s32 %s19, %s31
      %s111 = ssub.s32 %s20, %s27
      %s112 = sor.u32 %s110, %s111
      %p113 = scmp.eq.s32.totalorder %s112, 0
      %s115 = sadd.s32 %s114, 1
      %s116 = scalar_select %p113, %s114, %s115
      %p119 = pneg %p113
      %p120 = scmp.eq.s32.totalorder %s12, 1
      %p121 = por %p119, %p120
      %p122 = scmp.ne.s32.totalorder %s114, %s117
      %p123 = scmp.eq.s32.totalorder %s12, 0
      %p124 = por %p122, %p123
      %p125 = scmp.ne.s32.totalorder %s114, %s117
      %p126 = scmp.eq.s32.totalorder %s17, 1
      %p127 = por %p125, %p126
      %p128 = scmp.ne.s32.totalorder %s117, %s118
      %p129 = scmp.eq.s32.totalorder %s17, 0
      %p130 = por %p128, %p129
      %p131 = scmp.ne.s32.totalorder %s117, %s118
      %p132 = scmp.eq.s32.totalorder %s18, 1
      %p133 = por %p131, %p132
      %p135 = scmp.ne.s32.totalorder %s118, %s134
      %p136 = scmp.eq.s32.totalorder %s18, 0
      %p137 = por %p135, %p136
      %p138 = scmp.le.s32.totalorder 1, %s12
      %p139 = scmp.lt.s32.totalorder %s12, 3
      %p140 = pnand %p138, %p139
      %p141 = pneg %p140
      // Predicated region
      $region9: #{tpu_custom_call.1} parent=5 // pred_check
        _
      $region10: #{tpu_custom_call.1} parent=5 // pred_check_branch
        %143 = sbr.rel (%p140) target = $region12
      $region11: #{tpu_custom_call.1} parent=5 // pred_region
        %s144 = ssub.s32 %s12, 1
        // Predicated region
        $region13: #{tpu_custom_call.1} parent=11 // pred_check
          %p145 = pneg %p76
        $region14: #{tpu_custom_call.1} parent=11 // pred_check_branch
          %147 = sbr.rel (%p145) target = $region16
        $region15: #{tpu_custom_call.1} parent=11 // pred_region
          %s148 = smul.u32 16, %s22
          %p149 = scmp.lt.s32.totalorder %s148, 15
          %s150 = scalar_select %p149, %s148, 15
          %s151 = smul.addr %s150, 8
          %s152 = scalar_lea.vmem %s1, %s151
          %s153 = smul.u32 16, %s22
        $region16: #{tpu_custom_call.1} parent=11 // pred_fallthru
          _
        // Predicated region
        $region17: #{tpu_custom_call.1} parent=11 // pred_check
          %p154 = pneg %p102
        $region18: #{tpu_custom_call.1} parent=11 // pred_check_branch
          %156 = sbr.rel (%p154) target = $region20
        $region19: #{tpu_custom_call.1} parent=11 // pred_region
          %p157 = scmp.lt.s32.totalorder %s22, 0
          %s158 = scalar_select %p157, %s22, 0
          %s159 = scalar_lea.vmem %s2, %s158
        $region20: #{tpu_custom_call.1} parent=11 // pred_fallthru
          _
      $region12: #{tpu_custom_call.1} parent=5 // pred_fallthru
        _
      %p160 = scmp.lt.s32.totalorder %s12, 2
      // Predicated region
      $region21: #{tpu_custom_call.1} parent=5 // pred_check
        %p161 = pneg %p160
      $region22: #{tpu_custom_call.1} parent=5 // pred_check_branch
        %163 = sbr.rel (%p161) target = $region24
      $region23: #{tpu_custom_call.1} parent=5 // pred_region
        // Predicated region
        $region25: #{tpu_custom_call.1} parent=23 // pred_check
          %p164 = pneg %p44
        $region26: #{tpu_custom_call.1} parent=23 // pred_check_branch
          %166 = sbr.rel (%p164) target = $region28
        $region27: #{tpu_custom_call.1} parent=23 // pred_region
          %s167 = smul.u32 2, %s19
          %p168 = scmp.lt.s32.totalorder %s167, 3
          %s169 = scalar_select %p168, %s167, 3
          %s170 = smul.addr %s169, 8
          %s171 = scalar_lea.vmem %s0, %s170
          %s172 = smul.u32 2, %s19
        $region28: #{tpu_custom_call.1} parent=23 // pred_fallthru
          _
      $region24: #{tpu_custom_call.1} parent=5 // pred_fallthru
        _
      %p173 = scmp.le.s32.totalorder 1, %s12
      %p174 = scmp.lt.s32.totalorder %s12, 3
      %p175 = pnand %p173, %p174
      %p176 = pneg %p175
      // Predicated region
      $region29: #{tpu_custom_call.1} parent=5 // pred_check
        _
      $region30: #{tpu_custom_call.1} parent=5 // pred_check_branch
        %178 = sbr.rel (%p175) target = $region32
      $region31: #{tpu_custom_call.1} parent=5 // pred_region
        %s179 = ssub.s32 %s12, 1
        %s180 = smul.u32 2, %s21
        %p181 = scmp.lt.s32.totalorder %s180, 3
        %s182 = scalar_select %p181, %s180, 3
        %s183 = smul.addr %s182, 8
        %s184 = scalar_lea.vmem %s0, %s183
        %p185 = pneg %p50
        %p186 = pneg %p47
        %s187 = smul.u32 16, %s22
        %p188 = scmp.lt.s32.totalorder %s187, 15
        %s189 = scalar_select %p188, %s187, 15
        %s190 = smul.addr %s189, 8
        %s191 = scalar_lea.vmem %s1, %s190
        %p192 = pneg %p76
        %p193 = pneg %p73
        %p194 = scmp.lt.s32.totalorder %s22, 0
        %s195 = scalar_select %p194, %s22, 0
        %s196 = scalar_lea.vmem %s2, %s195
        %p197 = pneg %p102
        %p198 = pneg %p99
        %p199 = pneg %p130
        %p200 = pneg %p127
        %s201 = sand.u32 %s117, 1
        %s202 = scalar_lea.sflag [#allocation3], %s201
        %s203 = sand.u32 %s117, 1
        %s204 = smul.addr %s203, 16
        %s205 = scalar_lea.vmem [#allocation2], %s204
        %s206 = smul.u32 2, %s21
        %p207 = scmp.lt.s32.totalorder %s206, 3
        %s208 = scalar_select %p207, %s206, 3
        %s209 = smul.addr %s208, 8
        %s210 = scalar_lea.vmem %s0, %s209
        %s211 = smul.u32 2, %s21
        %s212 = smul.u32 16, %s22
        %p213 = scmp.lt.s32.totalorder %s212, 15
        %s214 = scalar_select %p213, %s212, 15
        %s215 = smul.addr %s214, 8
        %s216 = scalar_lea.vmem %s1, %s215
        %s217 = smul.u32 16, %s22
        %p218 = scmp.lt.s32.totalorder %s22, 0
        %s219 = scalar_select %p218, %s22, 0
        %s220 = scalar_lea.vmem %s2, %s219
        %s221 = smul.u32 2, %s21
        %v222 = vld [vmem:[%s210] sm:$0xff]
        %v223 = vld [vmem:[%s210 + $0x8] sm:$0xff]
        %v224 = vld [vmem:[%s216] sm:$0xff]
        %v225 = vld [vmem:[%s216 + $0x8] sm:$0xff]
        %v226 = vld [vmem:[%s216 + $0x10] sm:$0xff]
        %v227 = vld [vmem:[%s216 + $0x18] sm:$0xff]
        %v228 = vld [vmem:[%s216 + $0x20] sm:$0xff]
        %v229 = vld [vmem:[%s216 + $0x28] sm:$0xff]
        %v230 = vld [vmem:[%s216 + $0x30] sm:$0xff]
        %v231 = vld [vmem:[%s216 + $0x38] sm:$0xff]
        %v232 = vld [vmem:[%s216 + $0x40] sm:$0xff]
        %v233 = vld [vmem:[%s216 + $0x48] sm:$0xff]
        %v234 = vld [vmem:[%s216 + $0x50] sm:$0xff]
        %v235 = vld [vmem:[%s216 + $0x58] sm:$0xff]
        %v236 = vld [vmem:[%s216 + $0x60] sm:$0xff]
        %v237 = vld [vmem:[%s216 + $0x68] sm:$0xff]
        %v238 = vld [vmem:[%s216 + $0x70] sm:$0xff]
        %v239 = vld [vmem:[%s216 + $0x78] sm:$0xff]
        %v240 = vld [vmem:[%s220] sm:$0x1]
        %v242 = vlaneseq
        %v243 = vshrl.u32 %v242, 7
        %v244 = vsub.s32 0, %v243
        %v245 = vrot.slane %v240, %v244
        %vm247 = vcmask 31744
        %v249 = vsel %vm247, %v222, 0
        %v252 = vsel %vm247, %v223, 0
        %v255 = vsel %vm247, %v224, 0
        %v258 = vsel %vm247, %v225, 0
        %v261 = vsel %vm247, %v226, 0
        %v264 = vsel %vm247, %v227, 0
        %v267 = vsel %vm247, %v228, 0
        %v270 = vsel %vm247, %v229, 0
        %v273 = vsel %vm247, %v230, 0
        %v276 = vsel %vm247, %v231, 0
        %v279 = vsel %vm247, %v232, 0
        %v282 = vsel %vm247, %v233, 0
        %v285 = vsel %vm247, %v234, 0
        %v288 = vsel %vm247, %v235, 0
        %v291 = vsel %vm247, %v236, 0
        %v294 = vsel %vm247, %v237, 0
        %v297 = vsel %vm247, %v238, 0
        %v300 = vsel %vm247, %v239, 0
        %302 = vmatprep.subr.mxu0 0.0
        %303 = vmatpush1.xpose.msra.mxu0 %v255
        %304 = vmatprep.subr.mxu0 0.0
        %305 = vmatpush1.xpose.msra.mxu0 %v258
        %306 = vmatprep.subr.mxu0 0.0
        %307 = vmatpush1.xpose.msra.mxu0 %v261
        %308 = vmatprep.subr.mxu0 0.0
        %309 = vmatpush1.xpose.msra.mxu0 %v264
        %310 = vmatprep.subr.mxu0 0.0
        %311 = vmatpush1.xpose.msra.mxu0 %v267
        %312 = vmatprep.subr.mxu0 0.0
        %313 = vmatpush1.xpose.msra.mxu0 %v270
        %314 = vmatprep.subr.mxu0 0.0
        %315 = vmatpush1.xpose.msra.mxu0 %v273
        %316 = vmatprep.subr.mxu0 0.0
        %317 = vmatpush1.xpose.msra.mxu0 %v276
        %318 = vmatprep.subr.mxu0 0.0
        %319 = vmatpush1.xpose.msra.mxu0 %v279
        %320 = vmatprep.subr.mxu0 0.0
        %321 = vmatpush1.xpose.msra.mxu0 %v282
        %322 = vmatprep.subr.mxu0 0.0
        %323 = vmatpush1.xpose.msra.mxu0 %v285
        %324 = vmatprep.subr.mxu0 0.0
        %325 = vmatpush1.xpose.msra.mxu0 %v288
        %326 = vmatprep.subr.mxu0 0.0
        %327 = vmatpush1.xpose.msra.mxu0 %v291
        %328 = vmatprep.subr.mxu0 0.0
        %329 = vmatpush1.xpose.msra.mxu0 %v294
        %330 = vmatprep.subr.mxu0 0.0
        %331 = vmatpush1.xpose.msra.mxu0 %v297
        %332 = vmatprep.subr.mxu0 0.0
        %333 = vmatpush1.xpose.msra.mxu0 %v300
        %334 = vmatprep.subr.mxu0 0.0
        %335 = vmatpush1.xpose.msra.mxu0 0.0
        %336 = vmatprep.subr.mxu0 0.0
        %337 = vmatpush1.xpose.msra.mxu0 0.0
        %338 = vmatprep.subr.mxu0 0.0
        %339 = vmatpush1.xpose.msra.mxu0 0.0
        %340 = vmatprep.subr.mxu0 0.0
        %341 = vmatpush1.xpose.msra.mxu0 0.0
        %342 = vmatprep.subr.mxu0 0.0
        %343 = vmatpush1.xpose.msra.mxu0 0.0
        %344 = vmatprep.subr.mxu0 0.0
        %345 = vmatpush1.xpose.msra.mxu0 0.0
        %346 = vmatprep.subr.mxu0 0.0
        %347 = vmatpush1.xpose.msra.mxu0 0.0
        %348 = vmatprep.subr.mxu0 0.0
        %349 = vmatpush1.xpose.msra.mxu0 0.0
        %350 = vmatprep.subr.mxu0 0.0
        %351 = vmatpush1.xpose.msra.mxu0 0.0
        %352 = vmatprep.subr.mxu0 0.0
        %353 = vmatpush1.xpose.msra.mxu0 0.0
        %354 = vmatprep.subr.mxu0 0.0
        %355 = vmatpush1.xpose.msra.mxu0 0.0
        %356 = vmatprep.subr.mxu0 0.0
        %357 = vmatpush1.xpose.msra.mxu0 0.0
        %358 = vmatprep.subr.mxu0 0.0
        %359 = vmatpush1.xpose.msra.mxu0 0.0
        %360 = vmatprep.subr.mxu0 0.0
        %361 = vmatpush1.xpose.msra.mxu0 0.0
        %362 = vmatprep.subr.mxu0 0.0
        %363 = vmatpush1.xpose.msra.mxu0 0.0
        %364 = vmatprep.subr.mxu0 0.0
        %365 = vmatpush1.xpose.msra.mxu0 0.0
        %366 = vmatprep.mubr.f32.mxu0 0.0
        %367 = vmatmul.mubr.f32.gmra.mrb[0].mxu0 %v249
        %v368 = vpop.f32.mrb[0].mxu0
        %v369 = vadd.f32 %v245, %v368
        %v370 = vpop.f32.mrb[0].mxu0
        %371 = vmatprep.mubr.f32.mxu0 0.0
        %372 = vmatmul.mubr.f32.gmra.mrb[0].mxu0 %v252
        %v373 = vpop.f32.mrb[0].mxu0
        %v374 = vadd.f32 %v245, %v373
        %v375 = vpop.f32.mrb[0].mxu0
        %376 = vdwg.mxu0
        %377 = vst [vmem:[%s205] sm:$0xff] %v369
        %378 = vst [vmem:[%s205 + $0x8] sm:$0xff] %v374
        %s379 = sand.u32 %s117, 1
        %s380 = scalar_lea.sflag [#allocation3], %s379
        %s381 = sand.u32 %s117, 1
        %s382 = smul.addr %s381, 16
        %s383 = scalar_lea.vmem [#allocation2], %s382
        // Predicated region
        $region33: #{tpu_custom_call.1} parent=31 // pred_check
          %p384 = pneg %p127
        $region34: #{tpu_custom_call.1} parent=31 // pred_check_branch
          %386 = sbr.rel (%p384) target = $region36
        $region35: #{tpu_custom_call.1} parent=31 // pred_region
          %s387 = smul.u32 2, %s21
          %s389 = ssub.s32 256, 256
          %390 = vsyncadd %s380, %s389
          %s391 = sadd.s32 %s22, %s387
          %s392 = smul.addr %s391, 128
          %s393 = scalar_lea.hbm %s3, %s392
          %s394 = sshll.u32 %s383, 4
          %s395 = int_to_ptr.vmem [resolvable:$true] %s394
          %400 = dma.vmem_to_hbm [thread:$0]  %s395, 256, %s393, %s380, 128, 128, 8
        $region36: #{tpu_custom_call.1} parent=31 // pred_fallthru
          _
      $region32: #{tpu_custom_call.1} parent=5 // pred_fallthru
        _
      %p401 = scmp.le.s32.totalorder 2, %s12
      // Predicated region
      $region37: #{tpu_custom_call.1} parent=5 // pred_check
        %p402 = pneg %p401
      $region38: #{tpu_custom_call.1} parent=5 // pred_check_branch
        %404 = sbr.rel (%p402) target = $region40
      $region39: #{tpu_custom_call.1} parent=5 // pred_region
        %s405 = ssub.s32 %s12, 2
        // Predicated region
        $region41: #{tpu_custom_call.1} parent=39 // pred_check
          %p406 = pneg %p133
        $region42: #{tpu_custom_call.1} parent=39 // pred_check_branch
          %408 = sbr.rel (%p406) target = $region44
        $region43: #{tpu_custom_call.1} parent=39 // pred_region
          %s409 = sand.u32 %s118, 1
          %s410 = scalar_lea.sflag [#allocation3], %s409
          %s411 = sand.u32 %s118, 1
          %s412 = smul.addr %s411, 16
          %s413 = scalar_lea.vmem [#allocation2], %s412
          %414 = dma.done %s410, 256
        $region44: #{tpu_custom_call.1} parent=39 // pred_fallthru
          _
      $region40: #{tpu_custom_call.1} parent=5 // pred_fallthru
        _
    $region6: #{tpu_custom_call.1} parent=1 // loop_footer
      %s16 = sadd.s32 1, %s12
    $region7: #{tpu_custom_call.1} parent=1 // loop_footer_branch
      %11 = sbr.rel target = $region3
    $region8: #{tpu_custom_call.1} parent=1 // loop_exit
      _
    %415 = vsyncpa [#allocation3], 1
    %s416 = scalar_lea.sflag [#allocation3], 1
    %417 = vsyncpa %s416, 1

// kernel: tpu_custom_call.1
$region0: #{tpu_custom_call.1}
  #allocation0 [shape = 'u32[]', space=smem, size = 0x4, offset = 0x4, fixed_abs, tag = 'smem constant byte address 0x4 - core index']
  #allocation1 [shape = 'u32[144,128]{1,0:T(1,128)}', space=vmem, size = 0x12000, scoped, tag = 'internal scratch']
  %s0 = inlined_call_operand.vmem [shape: f32[32,4], index: 0, kind: input, shape index: {}]
  %s1 = inlined_call_operand.vmem [shape: f32[128,4], index: 1, kind: input, shape index: {}]
  %s2 = inlined_call_operand.vmem [shape: f32[1,128], index: 2, kind: input, shape index: {}]
  %s3 = inlined_call_operand.hbm [shape: f32[32,128], index: 3, kind: output, shape index: {}]
  %s4 = sld [smem:[#allocation0]]
  $region45: #{tpu_custom_call.1} parent=0
    _
  %s6 = ssub.s32 1, %s4
  %s7 = scalar_select 0, %s6, %s4
  $region1: #{tpu_custom_call.1} parent=0
    #allocation2 [shape = 'u8[16384]{0}', space=vmem, size = 0x4000, scoped, tag = 'output window, operand 0']
    #allocation3 [shape = 's32[2]{0}', space=sflag, size = 0x8, scoped, tag = 'scoped memory for tpu_custom_call.1']
    %8 = vsyncpa [#allocation3], 0
    %s9 = scalar_lea.sflag [#allocation3], 1
    %10 = vsyncpa %s9, 0
    loop: start=0, step=1, limit=4
    $region2: #{tpu_custom_call.1} parent=1 // loop_pre_header
      _
    $region3: #{tpu_custom_call.1} parent=1 // loop_header
      %s12 = sphi 0, %s16
      %p13 = scmp.ge.s32.totalorder %s12, 4
      %s19 = sphi 0, %s31
      %s20 = sphi 0, %s27
      %s21 = sphi 0, %s19
      %s22 = sphi 0, %s20
      %s23 = sphi 0, %s21
      %s24 = sphi 0, %s22
      %s34 = sphi 0, %s36
      %s37 = sphi 0, %s34
      %s38 = sphi 0, %s37
      %s54 = sphi 0, %s38
      %s60 = sphi 0, %s62
      %s63 = sphi 0, %s60
      %s64 = sphi 0, %s63
      %s80 = sphi 0, %s64
      %s86 = sphi 0, %s88
      %s89 = sphi 0, %s86
      %s90 = sphi 0, %s89
      %s106 = sphi 0, %s90
      %s114 = sphi 0, %s116
      %s117 = sphi 0, %s114
      %s118 = sphi 0, %s117
      %s134 = sphi 0, %s118
    $region4: #{tpu_custom_call.1} parent=1 // loop_header_branch
      %15 = sbr.rel (%p13) target = $region8
    $region5: #{tpu_custom_call.1} parent=1 // loop_body
      %s17 = ssub.s32 %s12, 1
      %s18 = ssub.s32 %s12, 2
      %s25 = sadd.s32 1, %s20
      %p26 = scmp.ge.s32.totalorder %s25, 1
      %s27 = scalar_select %p26, 0, %s25
      %s28 = sadd.s32 1, %s19
      %s29 = scalar_select %p26, %s28, %s19
      %p30 = scmp.ge.s32.totalorder %s29, 2
      %s31 = scalar_select %p30, 0, %s29
      %s32 = ssub.s32 %s19, %s31
      %p33 = scmp.eq.s32.totalorder %s32, 0
      %s35 = sadd.s32 %s34, 1
      %s36 = scalar_select %p33, %s34, %s35
      %p39 = pneg %p33
      %p40 = scmp.eq.s32.totalorder %s12, 1
      %p41 = por %p39, %p40
      %p42 = scmp.ne.s32.totalorder %s34, %s37
      %p43 = scmp.eq.s32.totalorder %s12, 0
      %p44 = por %p42, %p43
      %p45 = scmp.ne.s32.totalorder %s34, %s37
      %p46 = scmp.eq.s32.totalorder %s17, 1
      %p47 = por %p45, %p46
      %p48 = scmp.ne.s32.totalorder %s37, %s38
      %p49 = scmp.eq.s32.totalorder %s17, 0
      %p50 = por %p48, %p49
      %p51 = scmp.ne.s32.totalorder %s37, %s38
      %p52 = scmp.eq.s32.totalorder %s18, 1
      %p53 = por %p51, %p52
      %p55 = scmp.ne.s32.totalorder %s38, %s54
      %p56 = scmp.eq.s32.totalorder %s18, 0
      %p57 = por %p55, %p56
      %s58 = ssub.s32 %s20, %s27
      %p59 = scmp.eq.s32.totalorder %s58, 0
      %s61 = sadd.s32 %s60, 1
      %s62 = scalar_select %p59, %s60, %s61
      %p65 = pneg %p59
      %p66 = scmp.eq.s32.totalorder %s12, 1
      %p67 = por %p65, %p66
      %p68 = scmp.ne.s32.totalorder %s60, %s63
      %p69 = scmp.eq.s32.totalorder %s12, 0
      %p70 = por %p68, %p69
      %p71 = scmp.ne.s32.totalorder %s60, %s63
      %p72 = scmp.eq.s32.totalorder %s17, 1
      %p73 = por %p71, %p72
      %p74 = scmp.ne.s32.totalorder %s63, %s64
      %p75 = scmp.eq.s32.totalorder %s17, 0
      %p76 = por %p74, %p75
      %p77 = scmp.ne.s32.totalorder %s63, %s64
      %p78 = scmp.eq.s32.totalorder %s18, 1
      %p79 = por %p77, %p78
      %p81 = scmp.ne.s32.totalorder %s64, %s80
      %p82 = scmp.eq.s32.totalorder %s18, 0
      %p83 = por %p81, %p82
      %s84 = ssub.s32 %s20, %s27
      %p85 = scmp.eq.s32.totalorder %s84, 0
      %s87 = sadd.s32 %s86, 1
      %s88 = scalar_select %p85, %s86, %s87
      %p91 = pneg %p85
      %p92 = scmp.eq.s32.totalorder %s12, 1
      %p93 = por %p91, %p92
      %p94 = scmp.ne.s32.totalorder %s86, %s89
      %p95 = scmp.eq.s32.totalorder %s12, 0
      %p96 = por %p94, %p95
      %p97 = scmp.ne.s32.totalorder %s86, %s89
      %p98 = scmp.eq.s32.totalorder %s17, 1
      %p99 = por %p97, %p98
      %p100 = scmp.ne.s32.totalorder %s89, %s90
      %p101 = scmp.eq.s32.totalorder %s17, 0
      %p102 = por %p100, %p101
      %p103 = scmp.ne.s32.totalorder %s89, %s90
      %p104 = scmp.eq.s32.totalorder %s18, 1
      %p105 = por %p103, %p104
      %p107 = scmp.ne.s32.totalorder %s90, %s106
      %p108 = scmp.eq.s32.totalorder %s18, 0
      %p109 = por %p107, %p108
      %s110 = ssub.s32 %s19, %s31
      %s111 = ssub.s32 %s20, %s27
      %s112 = sor.u32 %s110, %s111
      %p113 = scmp.eq.s32.totalorder %s112, 0
      %s115 = sadd.s32 %s114, 1
      %s116 = scalar_select %p113, %s114, %s115
      %p119 = pneg %p113
      %p120 = scmp.eq.s32.totalorder %s12, 1
      %p121 = por %p119, %p120
      %p122 = scmp.ne.s32.totalorder %s114, %s117
      %p123 = scmp.eq.s32.totalorder %s12, 0
      %p124 = por %p122, %p123
      %p125 = scmp.ne.s32.totalorder %s114, %s117
      %p126 = scmp.eq.s32.totalorder %s17, 1
      %p127 = por %p125, %p126
      %p128 = scmp.ne.s32.totalorder %s117, %s118
      %p129 = scmp.eq.s32.totalorder %s17, 0
      %p130 = por %p128, %p129
      %p131 = scmp.ne.s32.totalorder %s117, %s118
      %p132 = scmp.eq.s32.totalorder %s18, 1
      %p133 = por %p131, %p132
      %p135 = scmp.ne.s32.totalorder %s118, %s134
      %p136 = scmp.eq.s32.totalorder %s18, 0
      %p137 = por %p135, %p136
      %p138 = scmp.le.s32.totalorder 1, %s12
      %p139 = scmp.lt.s32.totalorder %s12, 3
      %p140 = pnand %p138, %p139
      %p141 = pneg %p140
      // Predicated region
      $region9: #{tpu_custom_call.1} parent=5 // pred_check
        _
      $region10: #{tpu_custom_call.1} parent=5 // pred_check_branch
        %143 = sbr.rel (%p140) target = $region12
      $region11: #{tpu_custom_call.1} parent=5 // pred_region
        %s144 = ssub.s32 %s12, 1
        // Predicated region
        $region13: #{tpu_custom_call.1} parent=11 // pred_check
          %p145 = pneg %p76
        $region14: #{tpu_custom_call.1} parent=11 // pred_check_branch
          %147 = sbr.rel (%p145) target = $region16
        $region15: #{tpu_custom_call.1} parent=11 // pred_region
          %s148 = smul.u32 16, %s22
          %p149 = scmp.lt.s32.totalorder %s148, 15
          %s150 = scalar_select %p149, %s148, 15
          %s151 = smul.addr %s150, 8
          %s152 = scalar_lea.vmem %s1, %s151
          %s153 = smul.u32 16, %s22
        $region16: #{tpu_custom_call.1} parent=11 // pred_fallthru
          _
        // Predicated region
        $region17: #{tpu_custom_call.1} parent=11 // pred_check
          %p154 = pneg %p102
        $region18: #{tpu_custom_call.1} parent=11 // pred_check_branch
          %156 = sbr.rel (%p154) target = $region20
        $region19: #{tpu_custom_call.1} parent=11 // pred_region
          %p157 = scmp.lt.s32.totalorder %s22, 0
          %s158 = scalar_select %p157, %s22, 0
          %s159 = scalar_lea.vmem %s2, %s158
        $region20: #{tpu_custom_call.1} parent=11 // pred_fallthru
          _
      $region12: #{tpu_custom_call.1} parent=5 // pred_fallthru
        _
      %p160 = scmp.lt.s32.totalorder %s12, 2
      // Predicated region
      $region21: #{tpu_custom_call.1} parent=5 // pred_check
        %p161 = pneg %p160
      $region22: #{tpu_custom_call.1} parent=5 // pred_check_branch
        %163 = sbr.rel (%p161) target = $region24
      $region23: #{tpu_custom_call.1} parent=5 // pred_region
        // Predicated region
        $region25: #{tpu_custom_call.1} parent=23 // pred_check
          %p164 = pneg %p44
        $region26: #{tpu_custom_call.1} parent=23 // pred_check_branch
          %166 = sbr.rel (%p164) target = $region28
        $region27: #{tpu_custom_call.1} parent=23 // pred_region
          %s167 = smul.u32 2, %s19
          %p168 = scmp.lt.s32.totalorder %s167, 3
          %s169 = scalar_select %p168, %s167, 3
          %s170 = smul.addr %s169, 8
          %s171 = scalar_lea.vmem %s0, %s170
          %s172 = smul.u32 2, %s19
        $region28: #{tpu_custom_call.1} parent=23 // pred_fallthru
          _
      $region24: #{tpu_custom_call.1} parent=5 // pred_fallthru
        _
      %p173 = scmp.le.s32.totalorder 1, %s12
      %p174 = scmp.lt.s32.totalorder %s12, 3
      %p175 = pnand %p173, %p174
      %p176 = pneg %p175
      // Predicated region
      $region29: #{tpu_custom_call.1} parent=5 // pred_check
        _
      $region30: #{tpu_custom_call.1} parent=5 // pred_check_branch
        %178 = sbr.rel (%p175) target = $region32
      $region31: #{tpu_custom_call.1} parent=5 // pred_region
        %s179 = ssub.s32 %s12, 1
        %s180 = smul.u32 2, %s21
        %p181 = scmp.lt.s32.totalorder %s180, 3
        %s182 = scalar_select %p181, %s180, 3
        %s183 = smul.addr %s182, 8
        %s184 = scalar_lea.vmem %s0, %s183
        %p185 = pneg %p50
        %p186 = pneg %p47
        %s187 = smul.u32 16, %s22
        %p188 = scmp.lt.s32.totalorder %s187, 15
        %s189 = scalar_select %p188, %s187, 15
        %s190 = smul.addr %s189, 8
        %s191 = scalar_lea.vmem %s1, %s190
        %p192 = pneg %p76
        %p193 = pneg %p73
        %p194 = scmp.lt.s32.totalorder %s22, 0
        %s195 = scalar_select %p194, %s22, 0
        %s196 = scalar_lea.vmem %s2, %s195
        %p197 = pneg %p102
        %p198 = pneg %p99
        %p199 = pneg %p130
        %p200 = pneg %p127
        %s201 = sand.u32 %s117, 1
        %s202 = scalar_lea.sflag [#allocation3], %s201
        %s203 = sand.u32 %s117, 1
        %s204 = smul.addr %s203, 16
        %s205 = scalar_lea.vmem [#allocation2], %s204
        %s206 = smul.u32 2, %s21
        %p207 = scmp.lt.s32.totalorder %s206, 3
        %s208 = scalar_select %p207, %s206, 3
        %s209 = smul.addr %s208, 8
        %s210 = scalar_lea.vmem %s0, %s209
        %s211 = smul.u32 2, %s21
        %s212 = smul.u32 16, %s22
        %p213 = scmp.lt.s32.totalorder %s212, 15
        %s214 = scalar_select %p213, %s212, 15
        %s215 = smul.addr %s214, 8
        %s216 = scalar_lea.vmem %s1, %s215
        %s217 = smul.u32 16, %s22
        %p218 = scmp.lt.s32.totalorder %s22, 0
        %s219 = scalar_select %p218, %s22, 0
        %s220 = scalar_lea.vmem %s2, %s219
        %s221 = smul.u32 2, %s21
        %v222 = vld [vmem:[%s210] sm:$0xff]
        %v223 = vld [vmem:[%s210 + $0x8] sm:$0xff]
        %v224 = vld [vmem:[%s216] sm:$0xff]
        %v225 = vld [vmem:[%s216 + $0x8] sm:$0xff]
        %v226 = vld [vmem:[%s216 + $0x10] sm:$0xff]
        %v227 = vld [vmem:[%s216 + $0x18] sm:$0xff]
        %v228 = vld [vmem:[%s216 + $0x20] sm:$0xff]
        %v229 = vld [vmem:[%s216 + $0x28] sm:$0xff]
        %v230 = vld [vmem:[%s216 + $0x30] sm:$0xff]
        %v231 = vld [vmem:[%s216 + $0x38] sm:$0xff]
        %v232 = vld [vmem:[%s216 + $0x40] sm:$0xff]
        %v233 = vld [vmem:[%s216 + $0x48] sm:$0xff]
        %v234 = vld [vmem:[%s216 + $0x50] sm:$0xff]
        %v235 = vld [vmem:[%s216 + $0x58] sm:$0xff]
        %v236 = vld [vmem:[%s216 + $0x60] sm:$0xff]
        %v237 = vld [vmem:[%s216 + $0x68] sm:$0xff]
        %v238 = vld [vmem:[%s216 + $0x70] sm:$0xff]
        %v239 = vld [vmem:[%s216 + $0x78] sm:$0xff]
        %v240 = vld [vmem:[%s220] sm:$0x1]
        %v242 = vlaneseq
        %v243 = vshrl.u32 %v242, 7
        %v244 = vsub.s32 0, %v243
        %v245 = vrot.slane %v240, %v244
        %vm247 = vcmask 31744
        %v249 = vsel %vm247, %v222, 0
        %v252 = vsel %vm247, %v223, 0
        %v255 = vsel %vm247, %v224, 0
        %v258 = vsel %vm247, %v225, 0
        %v261 = vsel %vm247, %v226, 0
        %v264 = vsel %vm247, %v227, 0
        %v267 = vsel %vm247, %v228, 0
        %v270 = vsel %vm247, %v229, 0
        %v273 = vsel %vm247, %v230, 0
        %v276 = vsel %vm247, %v231, 0
        %v279 = vsel %vm247, %v232, 0
        %v282 = vsel %vm247, %v233, 0
        %v285 = vsel %vm247, %v234, 0
        %v288 = vsel %vm247, %v235, 0
        %v291 = vsel %vm247, %v236, 0
        %v294 = vsel %vm247, %v237, 0
        %v297 = vsel %vm247, %v238, 0
        %v300 = vsel %vm247, %v239, 0
        %302 = vmatprep.subr.mxu0 0.0
        %303 = vmatpush1.xpose.msra.mxu0 %v255
        %304 = vmatprep.subr.mxu0 0.0
        %305 = vmatpush1.xpose.msra.mxu0 %v258
        %306 = vmatprep.subr.mxu0 0.0
        %307 = vmatpush1.xpose.msra.mxu0 %v261
        %308 = vmatprep.subr.mxu0 0.0
        %309 = vmatpush1.xpose.msra.mxu0 %v264
        %310 = vmatprep.subr.mxu0 0.0
        %311 = vmatpush1.xpose.msra.mxu0 %v267
        %312 = vmatprep.subr.mxu0 0.0
        %313 = vmatpush1.xpose.msra.mxu0 %v270
        %314 = vmatprep.subr.mxu0 0.0
        %315 = vmatpush1.xpose.msra.mxu0 %v273
        %316 = vmatprep.subr.mxu0 0.0
        %317 = vmatpush1.xpose.msra.mxu0 %v276
        %318 = vmatprep.subr.mxu0 0.0
        %319 = vmatpush1.xpose.msra.mxu0 %v279
        %320 = vmatprep.subr.mxu0 0.0
        %321 = vmatpush1.xpose.msra.mxu0 %v282
        %322 = vmatprep.subr.mxu0 0.0
        %323 = vmatpush1.xpose.msra.mxu0 %v285
        %324 = vmatprep.subr.mxu0 0.0
        %325 = vmatpush1.xpose.msra.mxu0 %v288
        %326 = vmatprep.subr.mxu0 0.0
        %327 = vmatpush1.xpose.msra.mxu0 %v291
        %328 = vmatprep.subr.mxu0 0.0
        %329 = vmatpush1.xpose.msra.mxu0 %v294
        %330 = vmatprep.subr.mxu0 0.0
        %331 = vmatpush1.xpose.msra.mxu0 %v297
        %332 = vmatprep.subr.mxu0 0.0
        %333 = vmatpush1.xpose.msra.mxu0 %v300
        %334 = vmatprep.subr.mxu0 0.0
        %335 = vmatpush1.xpose.msra.mxu0 0.0
        %336 = vmatprep.subr.mxu0 0.0
        %337 = vmatpush1.xpose.msra.mxu0 0.0
        %338 = vmatprep.subr.mxu0 0.0
        %339 = vmatpush1.xpose.msra.mxu0 0.0
        %340 = vmatprep.subr.mxu0 0.0
        %341 = vmatpush1.xpose.msra.mxu0 0.0
        %342 = vmatprep.subr.mxu0 0.0
        %343 = vmatpush1.xpose.msra.mxu0 0.0
        %344 = vmatprep.subr.mxu0 0.0
        %345 = vmatpush1.xpose.msra.mxu0 0.0
        %346 = vmatprep.subr.mxu0 0.0
        %347 = vmatpush1.xpose.msra.mxu0 0.0
        %348 = vmatprep.subr.mxu0 0.0
        %349 = vmatpush1.xpose.msra.mxu0 0.0
        %350 = vmatprep.subr.mxu0 0.0
        %351 = vmatpush1.xpose.msra.mxu0 0.0
        %352 = vmatprep.subr.mxu0 0.0
        %353 = vmatpush1.xpose.msra.mxu0 0.0
        %354 = vmatprep.subr.mxu0 0.0
        %355 = vmatpush1.xpose.msra.mxu0 0.0
        %356 = vmatprep.subr.mxu0 0.0
        %357 = vmatpush1.xpose.msra.mxu0 0.0
        %358 = vmatprep.subr.mxu0 0.0
        %359 = vmatpush1.xpose.msra.mxu0 0.0
        %360 = vmatprep.subr.mxu0 0.0
        %361 = vmatpush1.xpose.msra.mxu0 0.0
        %362 = vmatprep.subr.mxu0 0.0
        %363 = vmatpush1.xpose.msra.mxu0 0.0
        %364 = vmatprep.subr.mxu0 0.0
        %365 = vmatpush1.xpose.msra.mxu0 0.0
        %366 = vmatprep.mubr.f32.mxu0 0.0
        %367 = vmatmul.mubr.f32.gmra.mrb[0].mxu0 %v249
        %v368 = vpop.f32.mrb[0].mxu0
        %v369 = vadd.f32 %v245, %v368
        %v370 = vpop.f32.mrb[0].mxu0
        %371 = vmatprep.mubr.f32.mxu0 0.0
        %372 = vmatmul.mubr.f32.gmra.mrb[0].mxu0 %v252
        %v373 = vpop.f32.mrb[0].mxu0
        %v374 = vadd.f32 %v245, %v373
        %v375 = vpop.f32.mrb[0].mxu0
        %376 = vdwg.mxu0
        %377 = vst [vmem:[%s205] sm:$0xff] %v369
        %378 = vst [vmem:[%s205 + $0x8] sm:$0xff] %v374
        %s379 = sand.u32 %s117, 1
        %s380 = scalar_lea.sflag [#allocation3], %s379
        %s381 = sand.u32 %s117, 1
        %s382 = smul.addr %s381, 16
        %s383 = scalar_lea.vmem [#allocation2], %s382
        // Predicated region
        $region33: #{tpu_custom_call.1} parent=31 // pred_check
          %p384 = pneg %p127
        $region34: #{tpu_custom_call.1} parent=31 // pred_check_branch
          %386 = sbr.rel (%p384) target = $region36
        $region35: #{tpu_custom_call.1} parent=31 // pred_region
          %s387 = smul.u32 2, %s21
          %s389 = ssub.s32 256, 256
          %390 = vsyncadd %s380, %s389
          %s391 = sadd.s32 %s22, %s387
          %s392 = smul.addr %s391, 128
          %s393 = scalar_lea.hbm %s3, %s392
          %s394 = sshll.u32 %s383, 4
          %s395 = int_to_ptr.vmem [resolvable:$true] %s394
          %400 = dma.vmem_to_hbm [thread:$0]  %s395, 256, %s393, %s380, 128, 128, 8
        $region36: #{tpu_custom_call.1} parent=31 // pred_fallthru
          _
      $region32: #{tpu_custom_call.1} parent=5 // pred_fallthru
        _
      %p401 = scmp.le.s32.totalorder 2, %s12
      // Predicated region
      $region37: #{tpu_custom_call.1} parent=5 // pred_check
        %p402 = pneg %p401
      $region38: #{tpu_custom_call.1} parent=5 // pred_check_branch
        %404 = sbr.rel (%p402) target = $region40
      $region39: #{tpu_custom_call.1} parent=5 // pred_region
        %s405 = ssub.s32 %s12, 2
        // Predicated region
        $region41: #{tpu_custom_call.1} parent=39 // pred_check
          %p406 = pneg %p133
        $region42: #{tpu_custom_call.1} parent=39 // pred_check_branch
          %408 = sbr.rel (%p406) target = $region44
        $region43: #{tpu_custom_call.1} parent=39 // pred_region
          %s409 = sand.u32 %s118, 1
          %s410 = scalar_lea.sflag [#allocation3], %s409
          %s411 = sand.u32 %s118, 1
          %s412 = smul.addr %s411, 16
          %s413 = scalar_lea.vmem [#allocation2], %s412
          %414 = dma.done %s410, 256
        $region44: #{tpu_custom_call.1} parent=39 // pred_fallthru
          _
      $region40: #{tpu_custom_call.1} parent=5 // pred_fallthru
        _
    $region6: #{tpu_custom_call.1} parent=1 // loop_footer
      %s16 = sadd.s32 1, %s12
    $region7: #{tpu_custom_call.1} parent=1 // loop_footer_branch
      %11 = sbr.rel target = $region3
    $region8: #{tpu_custom_call.1} parent=1 // loop_exit
      _
    %415 = vsyncpa [#allocation3], 1
    %s416 = scalar_lea.sflag [#allocation3], 1
    %417 = vsyncpa %s416, 1

</llo_original>
